<compile_context>
chip_gen: v6e
topology: v6e:2x2x1
jax: 0.10.0
libtpu: 0.0.40
codegen_flags: <defaults>
</compile_context>

<pallas_src>
import functools

import jax
import jax.numpy as jnp
from jax.experimental import pallas as pl
from jax.experimental.pallas import tpu as pltpu


def _contrastive_kernel(x1_ref, x2_ref, y_ref, out_ref, acc_ref, *, margin, n_rows):
    step = pl.program_id(0)

    @pl.when(step == 0)
    def _():
        acc_ref[0, 0] = jnp.float32(0.0)

    x1 = x1_ref[...].astype(jnp.float32)                      # (TILE_B, D)
    x2 = x2_ref[...].astype(jnp.float32)                      # (TILE_B, D)
    y = y_ref[...].astype(jnp.float32)                        # (TILE_B, 1)

    diff = x1 - x2
    dist_sq = jnp.sum(diff * diff, axis=1, keepdims=True)     # (TILE_B, 1)
    dist = jnp.sqrt(dist_sq)                                  # EUP slot (free-ish)
    neg = jnp.square(jnp.maximum(margin - dist, 0.0))
    loss = (1.0 - y) * dist_sq + y * neg                      # dist_sq used directly

    acc_ref[0, 0] += jnp.sum(loss)

    @pl.when(step == pl.num_programs(0) - 1)
    def _():
        out_ref[0, 0] = acc_ref[0, 0] / jnp.float32(n_rows)


def _round_up(x, m):
    return (x + m - 1) // m * m


def _choose_tile_b(b, d, itemsize, target_tile_bytes=2 << 20, max_rows=8192):
    rows = max(8, target_tile_bytes // max(1, d * itemsize))
    rows = max(8, (rows // 8) * 8)          # multiple of 8 sublanes
    rows = min(rows, max_rows)
    rows = min(rows, _round_up(b, 8))       # never bigger than the padded batch
    return int(rows)


def contrastive_loss(x1, x2, y, margin=1.0):
    """x1, x2: (B, D); y: (B,) 0/1 labels. Returns scalar mean contrastive loss."""
    B, D = x1.shape
    itemsize = jnp.dtype(x1.dtype).itemsize
    tile_b = _choose_tile_b(B, D, itemsize)
    b_pad = _round_up(B, tile_b)

    y2d = y.reshape(B, 1).astype(jnp.float32)
    if b_pad != B:
        pad = b_pad - B
        # Zero-padded rows contribute exactly 0 to the loss sum (see header).
        x1 = jnp.pad(x1, ((0, pad), (0, 0)))
        x2 = jnp.pad(x2, ((0, pad), (0, 0)))
        y2d = jnp.pad(y2d, ((0, pad), (0, 0)))

    num_tiles = b_pad // tile_b

    kernel = functools.partial(
        _contrastive_kernel, margin=float(margin), n_rows=int(B)
    )

    cost = pl.CostEstimate(
        flops=int(3 * B * D + 8 * B),
        transcendentals=int(B),
        bytes_accessed=int(2 * b_pad * D * itemsize + b_pad * 4 + 4),
    )

    out = pl.pallas_call(
        kernel,
        out_shape=jax.ShapeDtypeStruct((1, 1), jnp.float32),
        grid=(num_tiles,),
        in_specs=[
            pl.BlockSpec((tile_b, D), lambda i: (i, 0)),
            pl.BlockSpec((tile_b, D), lambda i: (i, 0)),
            pl.BlockSpec((tile_b, 1), lambda i: (i, 0)),
        ],
        out_specs=pl.BlockSpec(memory_space=pltpu.SMEM),
        scratch_shapes=[pltpu.SMEM((1, 1), jnp.float32)],
        compiler_params=pltpu.CompilerParams(
            dimension_semantics=("arbitrary",),   # accumulator -> sequential axis
            vmem_limit_bytes=32 * 1024 * 1024,    # safe headroom on v5e/v6e/v7x
        ),
        cost_estimate=cost,
    )(x1, x2, y2d)
    return out[0, 0]


def contrastive_loss_ref(x1, x2, y, margin=1.0):
    diff = x1 - x2
    dist_sq = jnp.sum(diff * diff, axis=1)
    dist = jnp.sqrt(dist_sq)
    loss = (1.0 - y) * dist_sq + y * jnp.square(jnp.maximum(margin - dist, 0.0))
    return jnp.mean(loss)


if __name__ == "__main__":
    key = jax.random.PRNGKey(0)
    k1, k2, k3 = jax.random.split(key, 3)

    B, D = 8, 32
    x1 = jax.random.normal(k1, (B, D), dtype=jnp.float32)
    x2 = jax.random.normal(k2, (B, D), dtype=jnp.float32)
    y = jax.random.bernoulli(k3, p=0.5, shape=(B,)).astype(jnp.float32)

    out = contrastive_loss(x1, x2, y, margin=1.0)
    out = jax.block_until_ready(out)

    ref = contrastive_loss_ref(x1, x2, y, margin=1.0)
    assert jnp.allclose(out, ref, rtol=1e-5, atol=1e-5), (out, ref)

    print("KERNEL_OK")
</pallas_src>

<mosaic_0001>
module attributes {stable_mosaic.version = 11 : i64} {
  func.func @_contrastive_kernel(%arg0: i32, %arg1: memref<8x32xf32, #tpu.memory_space<vmem>>, %arg2: memref<8x32xf32, #tpu.memory_space<vmem>>, %arg3: memref<8x1xf32, #tpu.memory_space<vmem>>, %arg4: memref<1x1xf32, #tpu.memory_space<smem>>, %arg5: memref<1x1xf32, #tpu.memory_space<smem>>) attributes {dimension_semantics = [#tpu.dimension_semantics<arbitrary>], iteration_bounds = array<i64: 1>, scalar_prefetch = 0 : i64, scratch_operands = 1 : i64, tpu.core_type = #tpu.core_type<tc>, window_params = [{transform_indices = @transform_0, window_bounds = array<i64: 8, 32>}, {transform_indices = @transform_1, window_bounds = array<i64: 8, 32>}, {transform_indices = @transform_2, window_bounds = array<i64: 8, 1>}, {transform_indices = @transform_3, window_bounds = array<i64: 1, 1>}]} {
    %c0_i32 = arith.constant 0 : i32
    %0 = arith.cmpi eq, %arg0, %c0_i32 : i32
    %1 = arith.extui %0 : i1 to i32
    %c0_i32_0 = arith.constant 0 : i32
    %2 = arith.cmpi ne, %1, %c0_i32_0 : i32
    scf.if %2 {
      %cst_16 = arith.constant 0.000000e+00 : f32
      %c0_17 = arith.constant 0 : index
      %c0_18 = arith.constant 0 : index
      %31 = memref.load %arg5[%c0_17, %c0_18] : memref<1x1xf32, #tpu.memory_space<smem>>
      memref.store %cst_16, %arg5[%c0_17, %c0_18] : memref<1x1xf32, #tpu.memory_space<smem>>
    } else {
    }
    %c0 = arith.constant 0 : index
    %c0_1 = arith.constant 0 : index
    %3 = vector.load %arg1[%c0, %c0_1] : memref<8x32xf32, #tpu.memory_space<vmem>>, vector<8x32xf32>
    %c0_2 = arith.constant 0 : index
    %c0_3 = arith.constant 0 : index
    %4 = vector.load %arg2[%c0_2, %c0_3] : memref<8x32xf32, #tpu.memory_space<vmem>>, vector<8x32xf32>
    %c0_4 = arith.constant 0 : index
    %c0_5 = arith.constant 0 : index
    %5 = vector.load %arg3[%c0_4, %c0_5] : memref<8x1xf32, #tpu.memory_space<vmem>>, vector<8x1xf32>
    %6 = arith.subf %3, %4 : vector<8x32xf32>
    %7 = arith.mulf %6, %6 : vector<8x32xf32>
    %cst = arith.constant dense<0.000000e+00> : vector<8xf32>
    %8 = vector.multi_reduction <add>, %7, %cst [1] : vector<8x32xf32> to vector<8xf32>
    %9 = vector.shape_cast %8 : vector<8xf32> to vector<8x1xf32>
    %10 = math.sqrt %9 : vector<8x1xf32>
    %cst_6 = arith.constant 1.000000e+00 : f32
    %11 = vector.broadcast %cst_6 : f32 to vector<8x1xf32>
    %12 = arith.subf %11, %10 : vector<8x1xf32>
    %cst_7 = arith.constant 0.000000e+00 : f32
    %13 = vector.broadcast %cst_7 : f32 to vector<8x1xf32>
    %14 = arith.maximumf %12, %13 : vector<8x1xf32>
    %15 = arith.mulf %14, %14 : vector<8x1xf32>
    %cst_8 = arith.constant 1.000000e+00 : f32
    %16 = vector.broadcast %cst_8 : f32 to vector<8x1xf32>
    %17 = arith.subf %16, %5 : vector<8x1xf32>
    %18 = arith.mulf %17, %9 : vector<8x1xf32>
    %19 = arith.mulf %5, %15 : vector<8x1xf32>
    %20 = arith.addf %18, %19 : vector<8x1xf32>
    %c0_9 = arith.constant 0 : index
    %c0_10 = arith.constant 0 : index
    %21 = memref.load %arg5[%c0_9, %c0_10] : memref<1x1xf32, #tpu.memory_space<smem>>
    %22 = vector.shape_cast %20 : vector<8x1xf32> to vector<1x8x1xf32>
    %cst_11 = arith.constant dense<0.000000e+00> : vector<1xf32>
    %23 = vector.multi_reduction <add>, %22, %cst_11 [1, 2] : vector<1x8x1xf32> to vector<1xf32>
    %24 = vector.shape_cast %23 : vector<1xf32> to vector<1x1x1xf32>
    %25 = vector.extract %24[0, 0, 0] : f32 from vector<1x1x1xf32>
    %26 = arith.addf %21, %25 : f32
    %c0_12 = arith.constant 0 : index
    %c0_13 = arith.constant 0 : index
    %27 = memref.load %arg5[%c0_12, %c0_13] : memref<1x1xf32, #tpu.memory_space<smem>>
    memref.store %26, %arg5[%c0_12, %c0_13] : memref<1x1xf32, #tpu.memory_space<smem>>
    %c0_i32_14 = arith.constant 0 : i32
    %28 = arith.cmpi eq, %arg0, %c0_i32_14 : i32
    %29 = arith.extui %28 : i1 to i32
    %c0_i32_15 = arith.constant 0 : i32
    %30 = arith.cmpi ne, %29, %c0_i32_15 : i32
    scf.if %30 {
      %c0_16 = arith.constant 0 : index
      %c0_17 = arith.constant 0 : index
      %31 = memref.load %arg5[%c0_16, %c0_17] : memref<1x1xf32, #tpu.memory_space<smem>>
      %cst_18 = arith.constant 8.000000e+00 : f32
      %32 = arith.divf %31, %cst_18 : f32
      %c0_19 = arith.constant 0 : index
      %c0_20 = arith.constant 0 : index
      %33 = memref.load %arg4[%c0_19, %c0_20] : memref<1x1xf32, #tpu.memory_space<smem>>
      memref.store %32, %arg4[%c0_19, %c0_20] : memref<1x1xf32, #tpu.memory_space<smem>>
    } else {
    }
    return
  }
  func.func @transform_0(%arg0: i32) -> (i32, i32) {
    %c0_i32 = arith.constant 0 : i32
    %c0_i32_0 = arith.constant 0 : i32
    return %arg0, %c0_i32 : i32, i32
  }
  func.func @transform_1(%arg0: i32) -> (i32, i32) {
    %c0_i32 = arith.constant 0 : i32
    %c0_i32_0 = arith.constant 0 : i32
    return %arg0, %c0_i32 : i32, i32
  }
  func.func @transform_2(%arg0: i32) -> (i32, i32) {
    %c0_i32 = arith.constant 0 : i32
    %c0_i32_0 = arith.constant 0 : i32
    return %arg0, %c0_i32 : i32, i32
  }
  func.func @transform_3(%arg0: i32) -> (i32, i32) {
    %c0_i32 = arith.constant 0 : i32
    %c0_i32_0 = arith.constant 0 : i32
    %c0_i32_1 = arith.constant 0 : i32
    return %c0_i32, %c0_i32_0 : i32, i32
  }
}

</mosaic_0001>

<llo_original>
// kernel: tpu_custom_call.1
$region0: #{tpu_custom_call.1}
  #allocation0 [shape = 'u32[]', space=smem, size = 0x4, offset = 0x4, fixed_abs, tag = 'smem constant byte address 0x4 - core index']
  #allocation1 [shape = 'u32[144,128]{1,0:T(1,128)}', space=vmem, size = 0x12000, scoped, tag = 'internal scratch']
  #allocation2 [shape = 'f32[1,1]{1,0:T(1,128)}', space=smem, size = 0x200, scoped, tag = 'scratch operand']
  %s0 = inlined_call_operand.vmem [shape: f32[8,32], index: 0, kind: input, shape index: {}]
  %s1 = inlined_call_operand.hbm [shape: f32[8,32], index: 1, kind: input, shape index: {}]
  %s2 = inlined_call_operand.vmem [shape: f32[8,1], index: 2, kind: input, shape index: {}]
  %s3 = inlined_call_operand.hbm [shape: f32[1,1], index: 3, kind: output, shape index: {}]
  %s4 = sld [smem:[#allocation0]]
  $region34: #{tpu_custom_call.1} parent=0
    _
  %s6 = ssub.s32 1, %s4
  %s7 = scalar_select 0, %s6, %s4
  $region1: #{tpu_custom_call.1} parent=0
    #allocation3 [shape = 'u8[4096]{0}', space=vmem, size = 0x1000, scoped, tag = 'input window, operand 1, single buffered']
    #allocation4 [shape = 's32[1]{0}', space=sflag, size = 0x4, scoped, tag = 'scoped memory for tpu_custom_call.1']
    #allocation5 [shape = 's32[1]{0}', space=sflag, size = 0x4, scoped, tag = 'scoped memory for tpu_custom_call.1']
    #allocation6 [shape = 'u8[512]{0}', space=smem, size = 0x200, scoped, tag = 'output window, operand 0, single buffered']
    %8 = vsyncpa [#allocation4], 0
    %9 = vsyncpa [#allocation5], 0
    // Predicated region
    $region2: #{tpu_custom_call.1} parent=1 // pred_check
      _
    $region3: #{tpu_custom_call.1} parent=1 // pred_check_branch
      %11 = sbr.rel (0) target = $region5
    $region4: #{tpu_custom_call.1} parent=1 // pred_region
      _
    $region5: #{tpu_custom_call.1} parent=1 // pred_fallthru
      _
    // Predicated region
    $region6: #{tpu_custom_call.1} parent=1 // pred_check
      _
    $region7: #{tpu_custom_call.1} parent=1 // pred_check_branch
      %13 = sbr.rel (0) target = $region9
    $region8: #{tpu_custom_call.1} parent=1 // pred_region
      %s15 = ssub.s32 128, 128
      %16 = vsyncadd [#allocation4], %s15
      %s18 = sshll.u32 [#allocation3], 4
      %s19 = int_to_ptr.vmem [resolvable:$true] %s18
      %21 = dma.hbm_to_vmem [thread:$0]  %s1, 128, %s19, [#allocation4]
    $region9: #{tpu_custom_call.1} parent=1 // pred_fallthru
      _
    // Predicated region
    $region10: #{tpu_custom_call.1} parent=1 // pred_check
      _
    $region11: #{tpu_custom_call.1} parent=1 // pred_check_branch
      %23 = sbr.rel (0) target = $region13
    $region12: #{tpu_custom_call.1} parent=1 // pred_region
      _
    $region13: #{tpu_custom_call.1} parent=1 // pred_fallthru
      _
    // Predicated region
    $region14: #{tpu_custom_call.1} parent=1 // pred_check
      _
    $region15: #{tpu_custom_call.1} parent=1 // pred_check_branch
      %25 = sbr.rel (0) target = $region17
    $region16: #{tpu_custom_call.1} parent=1 // pred_region
      %26 = dma.done [#allocation4], 128
    $region17: #{tpu_custom_call.1} parent=1 // pred_fallthru
      _
    %p27 = scmp.eq.s32.totalorder 0, 0
    // Predicated region
    $region18: #{tpu_custom_call.1} parent=1 // pred_check
      %p28 = pneg %p27
    $region19: #{tpu_custom_call.1} parent=1 // pred_check_branch
      %30 = sbr.rel (%p28) target = $region21
    $region20: #{tpu_custom_call.1} parent=1 // pred_region
      %s31 = scalar_lea.smem [#allocation2], 0
      %32 = sst [smem:[%s31]] 0.0
    $region21: #{tpu_custom_call.1} parent=1 // pred_fallthru
      _
    %v33 = vld [vmem:[%s0] sm:$0xff]
    %v34 = vld [vmem:[#allocation3] sm:$0xff]
    %v35 = vld [vmem:[%s2] sm:$0xff]
    %v36 = vsub.f32 %v33, %v34
    %v37 = vmul.f32 %v36, %v36
    %vm38 = vcmask 261120
    %v39 = vsel %vm38, %v37, 0.0
    %40 = vadd.xlane.f32.xlu0 %v39
    %v41 = vpop.xlane.xlu0 %40
    %v42 = vrsqrt.pop %v41
    %v43 = vmul.f32 %v41, %v42
    %vm44 = vcmp.eq.f32.partialorder %v41, inf
    %v45 = vsel %vm44, %v41, %v43
    %vm46 = vcmp.eq.f32.partialorder %v41, 0.0
    %v47 = vand.u32 %v41, 2147483648
    %v48 = vsel %vm46, %v47, %v45
    %v49 = vsub.f32 1.0, %v48
    %v50 = vmax.f32 %v49, 0.0
    %v51 = vmul.f32 %v50, %v50
    %v52 = vsub.f32 1.0, %v35
    %v53 = vmul.f32 %v52, %v41
    %v54 = vmul.f32 %v35, %v51
    %v55 = vadd.f32 %v53, %v54
    %s56 = sld [smem:[#allocation2]]
    %vm57 = vcmask 7168
    %v58 = vsel %vm57, %v55, 0.0
    %59 = vadd.xlane.f32.xlu0 %v58
    %v60 = vpop.xlane.xlu0 %59
    %v61 = vrot.slane %v60, 4
    %v62 = vadd.f32 %v60, %v61
    %v63 = vrot.slane %v62, 2
    %v64 = vadd.f32 %v62, %v63
    %v65 = vrot.slane %v64, 1
    %v66 = vadd.f32 %v64, %v65
    %s67 = vtos %v66
    %s68 = sadd.f32 %s56, %s67
    %s69 = scalar_lea.smem [#allocation2], 0
    %70 = sst [smem:[%s69]] %s68
    // Predicated region
    $region22: #{tpu_custom_call.1} parent=1 // pred_check
      %p71 = pneg %p27
    $region23: #{tpu_custom_call.1} parent=1 // pred_check_branch
      %73 = sbr.rel (%p71) target = $region25
    $region24: #{tpu_custom_call.1} parent=1 // pred_region
      %s74 = sld [smem:[#allocation2]]
      %v75 = vrcp.pop 8.0
      %s76 = vtos %v75
      %s77 = smul.f32 %s74, %s76
      %s78 = scalar_lea.smem [#allocation6], 0
      %79 = sst [smem:[%s78]] %s77
    $region25: #{tpu_custom_call.1} parent=1 // pred_fallthru
      _
    // Predicated region
    $region26: #{tpu_custom_call.1} parent=1 // pred_check
      _
    $region27: #{tpu_custom_call.1} parent=1 // pred_check_branch
      %81 = sbr.rel (0) target = $region29
    $region28: #{tpu_custom_call.1} parent=1 // pred_region
      %s83 = ssub.s32 16, 16
      %84 = vsyncadd [#allocation5], %s83
      %87 = dma.smem_to_hbm [#allocation6], 16, %s3, [#allocation5]
    $region29: #{tpu_custom_call.1} parent=1 // pred_fallthru
      _
    // Predicated region
    $region30: #{tpu_custom_call.1} parent=1 // pred_check
      _
    $region31: #{tpu_custom_call.1} parent=1 // pred_check_branch
      %89 = sbr.rel (0) target = $region33
    $region32: #{tpu_custom_call.1} parent=1 // pred_region
      %90 = dma.done [#allocation5], 16
    $region33: #{tpu_custom_call.1} parent=1 // pred_fallthru
      _
    %91 = sfence
    %92 = vsyncpa [#allocation4], 1
    %93 = vsyncpa [#allocation5], 1

</llo_original>
